<compile_context>
chip_gen: v7x
topology: tpu7x:2x2x1
jax: 0.10.0
libtpu: 0.0.40
codegen_flags: <defaults>
</compile_context>

<pallas_src>
import jax
import jax.numpy as jnp
from jax.experimental import pallas as pl
from jax.experimental.pallas import tpu as pltpu

# ------------------------- hyper-parameters ---------------------------------
HIDDEN_N = 32               # json_data['hyperpara']['hidden_n']
OBS_V_N = 16
OBS_R_N = 12
OBS_N = OBS_V_N + OBS_R_N   # 28 — fused observation width
ACT_N = 265                 # forced by fc9 = Linear(530, ACT_N): 2*ACT_N = 530
ACT_PAD = 384               # next multiple of 128 -> lane-dense output stores
H2 = 2 * HIDDEN_N           # 64 — width of the fused (block-diagonal) hidden
TB = 8                      # batch tile (one sublane group per grid step)


# ------------------------------ kernel --------------------------------------
def fused_kernel(obs_ref, w_in_ref, w_hid_ref, w_out_ref,
                 b_hid_ref, b_out_ref, out_ref):
    f32 = jnp.float32
    b_hid = b_hid_ref[...]                                   # (3, 64) — one vreg

    # layer 1: fc1 || fc5 merged into one dense (28, 64) matmul
    h = jnp.maximum(
        jnp.dot(obs_ref[...], w_in_ref[...], preferred_element_type=f32)
        + b_hid[0:1, :], 0.0)

    # layer 2: conv2-center || conv6-center ; layer 3: fc3 || fc7 (block-diag)
    h = jnp.maximum(jnp.dot(h, w_hid_ref[0], preferred_element_type=f32)
                    + b_hid[1:2, :], 0.0)
    h = jnp.maximum(jnp.dot(h, w_hid_ref[1], preferred_element_type=f32)
                    + b_hid[2:3, :], 0.0)

    # fc4 || fc8 and fc9 folded into a single affine map (padded to 384 lanes)
    out_ref[...] = (jnp.dot(h, w_out_ref[...], preferred_element_type=f32)
                    + b_out_ref[...])


# ------------------------------ wrapper --------------------------------------
def model_forward(obs_bvm, obs_ra, fused_params):
    w_in, w_hid, w_out, b_hid, b_out = fused_params
    B = obs_bvm.shape[0]

    # Merge the two observation inputs into one (B, 28) slab and pad the batch
    # to a multiple of the batch tile.
    obs = jnp.concatenate([obs_bvm, obs_ra], axis=1).astype(jnp.float32)
    pb = ((B + TB - 1) // TB) * TB
    if pb != B:
        obs = jnp.pad(obs, ((0, pb - B), (0, 0)))
    grid = (pb // TB,)

    const2 = lambda i: (0, 0)        # weights/biases stay VMEM-resident
    const3 = lambda i: (0, 0, 0)

    flops = 2 * pb * (OBS_N * H2 + 2 * H2 * H2 + H2 * ACT_PAD)
    weight_bytes = 4 * (OBS_N * H2 + 2 * H2 * H2 + H2 * ACT_PAD
                        + 3 * H2 + ACT_PAD)
    act_bytes = 4 * pb * (OBS_N + ACT_PAD)

    out = pl.pallas_call(
        fused_kernel,
        out_shape=jax.ShapeDtypeStruct((pb, ACT_PAD), jnp.float32),
        grid_spec=pltpu.PrefetchScalarGridSpec(
            num_scalar_prefetch=0,
            grid=grid,
            in_specs=[
                pl.BlockSpec((TB, OBS_N), lambda i: (i, 0)),     # obs streams
                pl.BlockSpec((OBS_N, H2), const2),               # weights are
                pl.BlockSpec((2, H2, H2), const3),               # fetched once
                pl.BlockSpec((H2, ACT_PAD), const2),             # (constant
                pl.BlockSpec((3, H2), const2),                   #  block index)
                pl.BlockSpec((1, ACT_PAD), const2),
            ],
            out_specs=pl.BlockSpec((TB, ACT_PAD), lambda i: (i, 0)),
        ),
        compiler_params=pltpu.CompilerParams(
            dimension_semantics=("parallel",)),                  # v7x: 2 TCs
        cost_estimate=pl.CostEstimate(
            flops=flops, transcendentals=0,
            bytes_accessed=weight_bytes + act_bytes),
    )(obs, w_in, w_hid, w_out, b_hid, b_out)

    return out[:B, :ACT_N]


# ------------------------- deterministic params ------------------------------
def init_raw_params(key):
    """Raw per-layer params, stored (in_features, out_features) for y = x @ W + b.

    Biases are drawn non-zero (the module zeroes them at __init__, but a trained
    checkpoint won't be zero) so the affine folding below is actually exercised
    by the correctness check.
    """
    ks = jax.random.split(key, 18)
    std = 0.1

    def w(k, shape):
        return (std * jax.random.normal(k, shape)).astype(jnp.float32)

    def b(k, n):
        return (std * jax.random.normal(k, (1, n))).astype(jnp.float32)

    w1 = w(ks[0], (OBS_V_N, HIDDEN_N));   b1 = b(ks[9], HIDDEN_N)
    conv2_w = w(ks[1], (HIDDEN_N, HIDDEN_N, 3))     # (out, in, 3)
    b2 = b(ks[10], HIDDEN_N)
    w3 = w(ks[2], (HIDDEN_N, HIDDEN_N));  b3 = b(ks[11], HIDDEN_N)
    w4 = w(ks[3], (HIDDEN_N, ACT_N));     b4 = b(ks[12], ACT_N)
    w5 = w(ks[4], (OBS_R_N, HIDDEN_N));   b5 = b(ks[13], HIDDEN_N)
    conv6_w = w(ks[5], (HIDDEN_N, HIDDEN_N, 3))
    b6 = b(ks[14], HIDDEN_N)
    w7 = w(ks[6], (HIDDEN_N, HIDDEN_N));  b7 = b(ks[15], HIDDEN_N)
    w8 = w(ks[7], (HIDDEN_N, ACT_N));     b8 = b(ks[16], ACT_N)
    w9 = w(ks[8], (2 * ACT_N, ACT_N));    b9 = b(ks[17], ACT_N)   # Linear(530, ACT_N)

    return (w1, b1, conv2_w, b2, w3, b3, w4, b4,
            w5, b5, conv6_w, b6, w7, b7, w8, b8, w9, b9)


def fuse_params(raw):
    """One-time (init-time) block-diagonal + affine folding. No per-call work.

    Precondition: the Conv1d layers are only ever applied to length-1 sequences
    (as produced by x.unsqueeze(-1)), so only the center tap contributes.
    """
    (w1, b1, conv2_w, b2, w3, b3, w4, b4,
     w5, b5, conv6_w, b6, w7, b7, w8, b8, w9, b9) = raw
    H = HIDDEN_N
    assert conv2_w.shape == (H, H, 3) and conv6_w.shape == (H, H, 3), \
        "center-tap extraction requires Conv1d(k=3) applied to L=1 sequences"
    w2m = jnp.transpose(conv2_w[:, :, 1])            # center tap -> Linear
    w6m = jnp.transpose(conv6_w[:, :, 1])
    z = lambda r, c: jnp.zeros((r, c), jnp.float32)

    # layer 1: cat(obs_bvm, obs_ra) @ w_in — one dense (28, 64) weight
    w_in = jnp.concatenate([
        jnp.concatenate([w1, z(OBS_V_N, H)], axis=1),
        jnp.concatenate([z(OBS_R_N, H), w5], axis=1)], axis=0)       # (28, 64)

    def blockdiag(a, c):
        top = jnp.concatenate([a, z(H, H)], axis=1)
        bot = jnp.concatenate([z(H, H), c], axis=1)
        return jnp.concatenate([top, bot], axis=0)                   # (64, 64)

    w_hid = jnp.stack([blockdiag(w2m, w6m), blockdiag(w3, w7)], axis=0)  # (2,64,64)

    # fc4/fc8 then fc9 on cat(action_bvm, action_ra) — all affine, so fold:
    #   out = h@w4@w9a + g@w8@w9b + (b4@w9a + b8@w9b + b9)
    w9a, w9b = w9[:ACT_N, :], w9[ACT_N:, :]
    w_out = jnp.concatenate([w4 @ w9a, w8 @ w9b], axis=0)            # (64, 265)
    b_out = b4 @ w9a + b8 @ w9b + b9                                 # (1, 265)
    # pad the lane (output) dimension to 384 -> unmasked full-vreg stores
    w_out = jnp.pad(w_out, ((0, 0), (0, ACT_PAD - ACT_N)))           # (64, 384)
    b_out = jnp.pad(b_out, ((0, 0), (0, ACT_PAD - ACT_N)))           # (1, 384)

    b_hid = jnp.concatenate([
        jnp.concatenate([b1, b5], axis=1),
        jnp.concatenate([b2, b6], axis=1),
        jnp.concatenate([b3, b7], axis=1)], axis=0)                  # (3, 64)

    return (w_in, w_hid, w_out, b_hid, b_out)


# --------------------------- pure-JAX reference -------------------------------
def reference_forward(obs_bvm, obs_ra, raw):
    """Layer-by-layer forward with the ORIGINAL (unfused) parameters."""
    (w1, b1, conv2_w, b2, w3, b3, w4, b4,
     w5, b5, conv6_w, b6, w7, b7, w8, b8, w9, b9) = raw
    relu = lambda t: jnp.maximum(t, 0.0)
    w2m = jnp.transpose(conv2_w[:, :, 1])   # conv2 on L=1, pad=1: center tap only
    w6m = jnp.transpose(conv6_w[:, :, 1])
    h = relu(obs_bvm @ w1 + b1)
    h = relu(h @ w2m + b2)
    h = relu(h @ w3 + b3)
    a_bvm = h @ w4 + b4
    g = relu(obs_ra @ w5 + b5)
    g = relu(g @ w6m + b6)
    g = relu(g @ w7 + b7)
    a_ra = g @ w8 + b8
    return jnp.concatenate([a_bvm, a_ra], axis=1) @ w9 + b9


# --------------------------------- main ---------------------------------------
if __name__ == "__main__":
    key = jax.random.PRNGKey(0)
    k_p, k_data = jax.random.split(key)

    raw_params = init_raw_params(k_p)
    fused_params = jax.tree_util.tree_map(
        jax.block_until_ready, fuse_params(raw_params))   # built once, off the call path

    # Check both the tiny (padded, single grid step) and a streamed batch
    # (multiple grid steps with VMEM-resident weights).
    for batch in (2, 64):
        k_v, k_r = jax.random.split(jax.random.fold_in(k_data, batch))
        obs_bvm = jax.random.normal(k_v, (batch, OBS_V_N), dtype=jnp.float32)
        obs_ra = jax.random.normal(k_r, (batch, OBS_R_N), dtype=jnp.float32)

        out = jax.block_until_ready(model_forward(obs_bvm, obs_ra, fused_params))
        ref = jax.block_until_ready(reference_forward(obs_bvm, obs_ra, raw_params))

        assert out.shape == (batch, ACT_N)
        assert jnp.allclose(out, ref, atol=1e-4, rtol=1e-4), \
            f"mismatch vs reference at batch={batch}"

    print("KERNEL_OK")
</pallas_src>

<mosaic_0001>
module attributes {stable_mosaic.version = 11 : i64} {
  func.func @fused_kernel(%arg0: i32, %arg1: memref<8x28xf32, #tpu.memory_space<vmem>>, %arg2: memref<28x64xf32, #tpu.memory_space<vmem>>, %arg3: memref<2x64x64xf32, #tpu.memory_space<vmem>>, %arg4: memref<64x384xf32, #tpu.memory_space<vmem>>, %arg5: memref<3x64xf32, #tpu.memory_space<vmem>>, %arg6: memref<1x384xf32, #tpu.memory_space<vmem>>, %arg7: memref<8x384xf32, #tpu.memory_space<vmem>>) attributes {dimension_semantics = [#tpu.dimension_semantics<parallel>], iteration_bounds = array<i64: 1>, scalar_prefetch = 0 : i64, scratch_operands = 0 : i64, tpu.core_type = #tpu.core_type<tc>, window_params = [{transform_indices = @transform_0, window_bounds = array<i64: 8, 28>}, {pipeline_mode = #tpu.pipeline_mode<synchronous>, transform_indices = @transform_1, window_bounds = array<i64: 28, 64>}, {pipeline_mode = #tpu.pipeline_mode<synchronous>, transform_indices = @transform_2, window_bounds = array<i64: 2, 64, 64>}, {pipeline_mode = #tpu.pipeline_mode<synchronous>, transform_indices = @transform_3, window_bounds = array<i64: 64, 384>}, {pipeline_mode = #tpu.pipeline_mode<synchronous>, transform_indices = @transform_4, window_bounds = array<i64: 3, 64>}, {pipeline_mode = #tpu.pipeline_mode<synchronous>, transform_indices = @transform_5, window_bounds = array<i64: 1, 384>}, {transform_indices = @transform_6, window_bounds = array<i64: 8, 384>}]} {
    %c0 = arith.constant 0 : index
    %c0_0 = arith.constant 0 : index
    %0 = vector.load %arg5[%c0, %c0_0] : memref<3x64xf32, #tpu.memory_space<vmem>>, vector<3x64xf32>
    %c0_1 = arith.constant 0 : index
    %c0_2 = arith.constant 0 : index
    %1 = vector.load %arg1[%c0_1, %c0_2] : memref<8x28xf32, #tpu.memory_space<vmem>>, vector<8x28xf32>
    %c0_3 = arith.constant 0 : index
    %c0_4 = arith.constant 0 : index
    %2 = vector.load %arg2[%c0_3, %c0_4] : memref<28x64xf32, #tpu.memory_space<vmem>>, vector<28x64xf32>
    %cst = arith.constant dense<0.000000e+00> : vector<8x64xf32>
    %3 = tpu.matmul %1, %2, %cst {dimension_numbers = #tpu.dot_dimension_numbers<[1], [0], [0], [1], [0, 0, 1, 1], [], []>} : vector<8x28xf32>, vector<28x64xf32>, vector<8x64xf32> -> vector<8x64xf32>
    %4 = vector.extract_strided_slice %0 {offsets = [0, 0], sizes = [1, 64], strides = [1, 1]} : vector<3x64xf32> to vector<1x64xf32>
    %5 = vector.broadcast %4 : vector<1x64xf32> to vector<8x64xf32>
    %6 = arith.addf %3, %5 : vector<8x64xf32>
    %cst_5 = arith.constant 0.000000e+00 : f32
    %7 = vector.broadcast %cst_5 : f32 to vector<8x64xf32>
    %8 = arith.maximumf %6, %7 : vector<8x64xf32>
    %c0_6 = arith.constant 0 : index
    %c0_7 = arith.constant 0 : index
    %c0_8 = arith.constant 0 : index
    %9 = vector.load %arg3[%c0_6, %c0_7, %c0_8] : memref<2x64x64xf32, #tpu.memory_space<vmem>>, vector<1x64x64xf32>
    %10 = vector.shape_cast %9 : vector<1x64x64xf32> to vector<64x64xf32>
    %cst_9 = arith.constant dense<0.000000e+00> : vector<8x64xf32>
    %11 = tpu.matmul %8, %10, %cst_9 {dimension_numbers = #tpu.dot_dimension_numbers<[1], [0], [0], [1], [0, 0, 1, 1], [], []>} : vector<8x64xf32>, vector<64x64xf32>, vector<8x64xf32> -> vector<8x64xf32>
    %12 = vector.extract_strided_slice %0 {offsets = [1, 0], sizes = [1, 64], strides = [1, 1]} : vector<3x64xf32> to vector<1x64xf32>
    %13 = vector.broadcast %12 : vector<1x64xf32> to vector<8x64xf32>
    %14 = arith.addf %11, %13 : vector<8x64xf32>
    %cst_10 = arith.constant 0.000000e+00 : f32
    %15 = vector.broadcast %cst_10 : f32 to vector<8x64xf32>
    %16 = arith.maximumf %14, %15 : vector<8x64xf32>
    %c1 = arith.constant 1 : index
    %c0_11 = arith.constant 0 : index
    %c0_12 = arith.constant 0 : index
    %17 = vector.load %arg3[%c1, %c0_11, %c0_12] : memref<2x64x64xf32, #tpu.memory_space<vmem>>, vector<1x64x64xf32>
    %18 = vector.shape_cast %17 : vector<1x64x64xf32> to vector<64x64xf32>
    %cst_13 = arith.constant dense<0.000000e+00> : vector<8x64xf32>
    %19 = tpu.matmul %16, %18, %cst_13 {dimension_numbers = #tpu.dot_dimension_numbers<[1], [0], [0], [1], [0, 0, 1, 1], [], []>} : vector<8x64xf32>, vector<64x64xf32>, vector<8x64xf32> -> vector<8x64xf32>
    %20 = vector.extract_strided_slice %0 {offsets = [2, 0], sizes = [1, 64], strides = [1, 1]} : vector<3x64xf32> to vector<1x64xf32>
    %21 = vector.broadcast %20 : vector<1x64xf32> to vector<8x64xf32>
    %22 = arith.addf %19, %21 : vector<8x64xf32>
    %cst_14 = arith.constant 0.000000e+00 : f32
    %23 = vector.broadcast %cst_14 : f32 to vector<8x64xf32>
    %24 = arith.maximumf %22, %23 : vector<8x64xf32>
    %c0_15 = arith.constant 0 : index
    %c0_16 = arith.constant 0 : index
    %25 = vector.load %arg4[%c0_15, %c0_16] : memref<64x384xf32, #tpu.memory_space<vmem>>, vector<64x384xf32>
    %cst_17 = arith.constant dense<0.000000e+00> : vector<8x384xf32>
    %26 = tpu.matmul %24, %25, %cst_17 {dimension_numbers = #tpu.dot_dimension_numbers<[1], [0], [0], [1], [0, 0, 1, 1], [], []>} : vector<8x64xf32>, vector<64x384xf32>, vector<8x384xf32> -> vector<8x384xf32>
    %c0_18 = arith.constant 0 : index
    %c0_19 = arith.constant 0 : index
    %27 = vector.load %arg6[%c0_18, %c0_19] : memref<1x384xf32, #tpu.memory_space<vmem>>, vector<1x384xf32>
    %28 = vector.broadcast %27 : vector<1x384xf32> to vector<8x384xf32>
    %29 = arith.addf %26, %28 : vector<8x384xf32>
    %c0_20 = arith.constant 0 : index
    %c0_21 = arith.constant 0 : index
    %30 = vector.load %arg7[%c0_20, %c0_21] : memref<8x384xf32, #tpu.memory_space<vmem>>, vector<8x384xf32>
    tpu.vector_store %arg7[%c0_20, %c0_21], %29 {strides = array<i32>} : memref<8x384xf32, #tpu.memory_space<vmem>>, vector<8x384xf32>,
    return
  }
  func.func @transform_0(%arg0: i32) -> (i32, i32) {
    %c0_i32 = arith.constant 0 : i32
    %c0_i32_0 = arith.constant 0 : i32
    return %arg0, %c0_i32 : i32, i32
  }
  func.func @transform_1(%arg0: i32) -> (i32, i32) {
    %c0_i32 = arith.constant 0 : i32
    %c0_i32_0 = arith.constant 0 : i32
    %c0_i32_1 = arith.constant 0 : i32
    return %c0_i32, %c0_i32_0 : i32, i32
  }
  func.func @transform_2(%arg0: i32) -> (i32, i32, i32) {
    %c0_i32 = arith.constant 0 : i32
    %c0_i32_0 = arith.constant 0 : i32
    %c0_i32_1 = arith.constant 0 : i32
    %c0_i32_2 = arith.constant 0 : i32
    return %c0_i32, %c0_i32_0, %c0_i32_1 : i32, i32, i32
  }
  func.func @transform_3(%arg0: i32) -> (i32, i32) {
    %c0_i32 = arith.constant 0 : i32
    %c0_i32_0 = arith.constant 0 : i32
    %c0_i32_1 = arith.constant 0 : i32
    return %c0_i32, %c0_i32_0 : i32, i32
  }
  func.func @transform_4(%arg0: i32) -> (i32, i32) {
    %c0_i32 = arith.constant 0 : i32
    %c0_i32_0 = arith.constant 0 : i32
    %c0_i32_1 = arith.constant 0 : i32
    return %c0_i32, %c0_i32_0 : i32, i32
  }
  func.func @transform_5(%arg0: i32) -> (i32, i32) {
    %c0_i32 = arith.constant 0 : i32
    %c0_i32_0 = arith.constant 0 : i32
    %c0_i32_1 = arith.constant 0 : i32
    return %c0_i32, %c0_i32_0 : i32, i32
  }
  func.func @transform_6(%arg0: i32) -> (i32, i32) {
    %c0_i32 = arith.constant 0 : i32
    %c0_i32_0 = arith.constant 0 : i32
    return %arg0, %c0_i32 : i32, i32
  }
}

</mosaic_0001>

<llo_original>
// kernel: tpu_custom_call.1
$region0: #{tpu_custom_call.1}
  #allocation0 [shape = 'u32[]', space=smem, size = 0x4, offset = 0x4, fixed_abs, tag = 'smem constant byte address 0x4 - core index']
  #allocation1 [shape = 'u32[144,128]{1,0:T(1,128)}', space=vmem, size = 0x12000, scoped, tag = 'internal scratch']
  %s0 = inlined_call_operand.hbm [shape: f32[8,28], index: 0, kind: input, shape index: {}]
  %s1 = inlined_call_operand.hbm [shape: f32[28,64], index: 1, kind: input, shape index: {}]
  %s2 = inlined_call_operand.hbm [shape: f32[2,64,64], index: 2, kind: input, shape index: {}]
  %s3 = inlined_call_operand.hbm [shape: f32[64,384], index: 3, kind: input, shape index: {}]
  %s4 = inlined_call_operand.vmem [shape: f32[3,64], index: 4, kind: input, shape index: {}]
  %s5 = inlined_call_operand.vmem [shape: f32[1,384], index: 5, kind: input, shape index: {}]
  %s6 = inlined_call_operand.hbm [shape: f32[8,384], index: 6, kind: output, shape index: {}]
  %s7 = sld [smem:[#allocation0]]
  $region50: #{tpu_custom_call.1} parent=0
    _
  %s9 = ssub.s32 1, %s7
  %s10 = scalar_select 0, %s9, %s7
  $region1: #{tpu_custom_call.1} parent=0
    #allocation2 [shape = 'u8[4096]{0}', space=vmem, size = 0x1000, scoped, tag = 'input window, operand 0, single buffered']
    #allocation3 [shape = 's32[1]{0}', space=sflag, size = 0x4, scoped, tag = 'scoped memory for tpu_custom_call.1']
    #allocation4 [shape = 's32[1]{0}', space=sflag, size = 0x4, scoped, tag = 'scoped memory for tpu_custom_call.1']
    #allocation5 [shape = 'u8[16384]{0}', space=vmem, size = 0x4000, scoped, tag = 'input window, operand 1, single buffered']
    #allocation6 [shape = 's32[1]{0}', space=sflag, size = 0x4, scoped, tag = 'scoped memory for tpu_custom_call.1']
    #allocation7 [shape = 'u8[65536]{0}', space=vmem, size = 0x10000, scoped, tag = 'input window, operand 2, single buffered']
    #allocation8 [shape = 'u8[98304]{0}', space=vmem, size = 0x18000, scoped, tag = 'input window, operand 3, single buffered']
    #allocation9 [shape = 's32[1]{0}', space=sflag, size = 0x4, scoped, tag = 'scoped memory for tpu_custom_call.1']
    #allocation10 [shape = 'u8[12288]{0}', space=vmem, size = 0x3000, scoped, tag = 'output window, operand 0, single buffered']
    %11 = vsyncpa [#allocation3], 0
    %12 = vsyncpa [#allocation6], 0
    %13 = vsyncpa [#allocation9], 0
    %14 = vsyncpa [#allocation4], 0
    // Predicated region
    $region2: #{tpu_custom_call.1} parent=1 // pred_check
      _
    $region3: #{tpu_custom_call.1} parent=1 // pred_check_branch
      %16 = sbr.rel (0) target = $region5
    $region4: #{tpu_custom_call.1} parent=1 // pred_region
      %s18 = ssub.s32 128, 128
      %19 = vsyncadd [#allocation3], %s18
      %s21 = sshll.u32 [#allocation2], 4
      %s22 = int_to_ptr.vmem [resolvable:$true] %s21
      %24 = dma.hbm_to_vmem [thread:$0]  %s0, 128, %s22, [#allocation3]
    $region5: #{tpu_custom_call.1} parent=1 // pred_fallthru
      _
    // Predicated region
    $region6: #{tpu_custom_call.1} parent=1 // pred_check
      _
    $region7: #{tpu_custom_call.1} parent=1 // pred_check_branch
      %26 = sbr.rel (0) target = $region9
    $region8: #{tpu_custom_call.1} parent=1 // pred_region
      %s28 = ssub.s32 512, 512
      %29 = vsyncadd [#allocation6], %s28
      %s30 = sshll.u32 [#allocation5], 4
      %s31 = int_to_ptr.vmem [resolvable:$true] %s30
      %36 = dma.hbm_to_vmem [thread:$0]  %s1, 512, %s31, [#allocation6], 128, 128, 8
    $region9: #{tpu_custom_call.1} parent=1 // pred_fallthru
      _
    // Predicated region
    $region10: #{tpu_custom_call.1} parent=1 // pred_check
      _
    $region11: #{tpu_custom_call.1} parent=1 // pred_check_branch
      %38 = sbr.rel (0) target = $region13
    $region12: #{tpu_custom_call.1} parent=1 // pred_region
      %s40 = ssub.s32 2048, 2048
      %41 = vsyncadd [#allocation6], %s40
      %s42 = sshll.u32 [#allocation7], 4
      %s43 = int_to_ptr.vmem [resolvable:$true] %s42
      %48 = dma.hbm_to_vmem [thread:$0]  %s2, 2048, %s43, [#allocation6], 128, 128, 8
    $region13: #{tpu_custom_call.1} parent=1 // pred_fallthru
      _
    // Predicated region
    $region14: #{tpu_custom_call.1} parent=1 // pred_check
      _
    $region15: #{tpu_custom_call.1} parent=1 // pred_check_branch
      %50 = sbr.rel (0) target = $region17
    $region16: #{tpu_custom_call.1} parent=1 // pred_region
      %s52 = ssub.s32 3072, 3072
      %53 = vsyncadd [#allocation9], %s52
      %s54 = sshll.u32 [#allocation8], 4
      %s55 = int_to_ptr.vmem [resolvable:$true] %s54
      %60 = dma.hbm_to_vmem [thread:$0]  %s3, 3072, %s55, [#allocation9], 384, 384, 24
    $region17: #{tpu_custom_call.1} parent=1 // pred_fallthru
      _
    // Predicated region
    $region18: #{tpu_custom_call.1} parent=1 // pred_check
      _
    $region19: #{tpu_custom_call.1} parent=1 // pred_check_branch
      %62 = sbr.rel (0) target = $region21
    $region20: #{tpu_custom_call.1} parent=1 // pred_region
      _
    $region21: #{tpu_custom_call.1} parent=1 // pred_fallthru
      _
    // Predicated region
    $region22: #{tpu_custom_call.1} parent=1 // pred_check
      _
    $region23: #{tpu_custom_call.1} parent=1 // pred_check_branch
      %64 = sbr.rel (0) target = $region25
    $region24: #{tpu_custom_call.1} parent=1 // pred_region
      _
    $region25: #{tpu_custom_call.1} parent=1 // pred_fallthru
      _
    // Predicated region
    $region26: #{tpu_custom_call.1} parent=1 // pred_check
      _
    $region27: #{tpu_custom_call.1} parent=1 // pred_check_branch
      %66 = sbr.rel (0) target = $region29
    $region28: #{tpu_custom_call.1} parent=1 // pred_region
      %67 = dma.done [#allocation3], 128
    $region29: #{tpu_custom_call.1} parent=1 // pred_fallthru
      _
    // Predicated region
    $region30: #{tpu_custom_call.1} parent=1 // pred_check
      _
    $region31: #{tpu_custom_call.1} parent=1 // pred_check_branch
      %69 = sbr.rel (0) target = $region33
    $region32: #{tpu_custom_call.1} parent=1 // pred_region
      %70 = dma.done [#allocation6], 512
    $region33: #{tpu_custom_call.1} parent=1 // pred_fallthru
      _
    // Predicated region
    $region34: #{tpu_custom_call.1} parent=1 // pred_check
      _
    $region35: #{tpu_custom_call.1} parent=1 // pred_check_branch
      %72 = sbr.rel (0) target = $region37
    $region36: #{tpu_custom_call.1} parent=1 // pred_region
      %73 = dma.done [#allocation6], 2048
    $region37: #{tpu_custom_call.1} parent=1 // pred_fallthru
      _
    // Predicated region
    $region38: #{tpu_custom_call.1} parent=1 // pred_check
      _
    $region39: #{tpu_custom_call.1} parent=1 // pred_check_branch
      %75 = sbr.rel (0) target = $region41
    $region40: #{tpu_custom_call.1} parent=1 // pred_region
      %76 = dma.done [#allocation9], 3072
    $region41: #{tpu_custom_call.1} parent=1 // pred_fallthru
      _
    %v77 = vld [vmem:[%s4] sm:$0x7]
    %v78 = vld [vmem:[#allocation2] sm:$0xff]
    %v79 = vld [vmem:[#allocation5] sm:$0xff]
    %v80 = vld [vmem:[#allocation5 + $0x8] sm:$0xff]
    %v81 = vld [vmem:[#allocation5 + $0x10] sm:$0xff]
    %v82 = vld [vmem:[#allocation5 + $0x18] sm:$0xf]
    %v83 = vlaneseq
    %v84 = vshrl.u32 %v83, 7
    %v85 = vsub.s32 0, %v84
    %v86 = vrot.slane %v77, %v85
    %vm87 = vcmask 228352
    %v89 = vsel %vm87, %v78, 0
    %vm91 = vcmask 1043456
    %v93 = vsel %vm91, %v82, 0
    %95 = vmatprep.subr.mxu0 0.0
    %96 = vmatpush1.msra.mxu0 %v79
    %97 = vmatprep.subr.mxu0 0.0
    %98 = vmatpush1.msra.mxu0 %v80
    %99 = vmatprep.subr.mxu0 0.0
    %100 = vmatpush1.msra.mxu0 %v81
    %101 = vmatprep.subr.mxu0 0.0
    %102 = vmatpush1.msra.mxu0 %v93
    %103 = vmatprep.subr.mxu0 0.0
    %104 = vmatpush1.msra.mxu0 0.0
    %105 = vmatprep.subr.mxu0 0.0
    %106 = vmatpush1.msra.mxu0 0.0
    %107 = vmatprep.subr.mxu0 0.0
    %108 = vmatpush1.msra.mxu0 0.0
    %109 = vmatprep.subr.mxu0 0.0
    %110 = vmatpush1.msra.mxu0 0.0
    %111 = vmatprep.subr.mxu0 0.0
    %112 = vmatpush1.msra.mxu0 0.0
    %113 = vmatprep.subr.mxu0 0.0
    %114 = vmatpush1.msra.mxu0 0.0
    %115 = vmatprep.subr.mxu0 0.0
    %116 = vmatpush1.msra.mxu0 0.0
    %117 = vmatprep.subr.mxu0 0.0
    %118 = vmatpush1.msra.mxu0 0.0
    %119 = vmatprep.subr.mxu0 0.0
    %120 = vmatpush1.msra.mxu0 0.0
    %121 = vmatprep.subr.mxu0 0.0
    %122 = vmatpush1.msra.mxu0 0.0
    %123 = vmatprep.subr.mxu0 0.0
    %124 = vmatpush1.msra.mxu0 0.0
    %125 = vmatprep.subr.mxu0 0.0
    %126 = vmatpush1.msra.mxu0 0.0
    %127 = vmatprep.subr.mxu0 0.0
    %128 = vmatpush1.msra.mxu0 0.0
    %129 = vmatprep.subr.mxu0 0.0
    %130 = vmatpush1.msra.mxu0 0.0
    %131 = vmatprep.subr.mxu0 0.0
    %132 = vmatpush1.msra.mxu0 0.0
    %133 = vmatprep.subr.mxu0 0.0
    %134 = vmatpush1.msra.mxu0 0.0
    %135 = vmatprep.subr.mxu0 0.0
    %136 = vmatpush1.msra.mxu0 0.0
    %137 = vmatprep.subr.mxu0 0.0
    %138 = vmatpush1.msra.mxu0 0.0
    %139 = vmatprep.subr.mxu0 0.0
    %140 = vmatpush1.msra.mxu0 0.0
    %141 = vmatprep.subr.mxu0 0.0
    %142 = vmatpush1.msra.mxu0 0.0
    %143 = vmatprep.subr.mxu0 0.0
    %144 = vmatpush1.msra.mxu0 0.0
    %145 = vmatprep.subr.mxu0 0.0
    %146 = vmatpush1.msra.mxu0 0.0
    %147 = vmatprep.subr.mxu0 0.0
    %148 = vmatpush1.msra.mxu0 0.0
    %149 = vmatprep.subr.mxu0 0.0
    %150 = vmatpush1.msra.mxu0 0.0
    %151 = vmatprep.subr.mxu0 0.0
    %152 = vmatpush1.msra.mxu0 0.0
    %153 = vmatprep.subr.mxu0 0.0
    %154 = vmatpush1.msra.mxu0 0.0
    %155 = vmatprep.subr.mxu0 0.0
    %156 = vmatpush1.msra.mxu0 0.0
    %157 = vmatprep.subr.mxu0 0.0
    %158 = vmatpush1.msra.mxu0 0.0
    %159 = vmatprep.mubr.f32.mxu0 0.0
    %160 = vmatmul.mubr.f32.gmra.mrb[0].mxu0 %v89
    %v161 = vpop.f32.mrb[0].mxu0
    %v162 = vadd.f32 %v86, %v161
    %v163 = vpop.f32.mrb[0].mxu0
    %164 = vdwg.mxu0
    %v165 = vmax.f32 %v162, 0.0
    %v166 = vld [vmem:[#allocation7] sm:$0xff]
    %v167 = vld [vmem:[#allocation7 + $0x8] sm:$0xff]
    %v168 = vld [vmem:[#allocation7 + $0x10] sm:$0xff]
    %v169 = vld [vmem:[#allocation7 + $0x18] sm:$0xff]
    %v170 = vld [vmem:[#allocation7 + $0x20] sm:$0xff]
    %v171 = vld [vmem:[#allocation7 + $0x28] sm:$0xff]
    %v172 = vld [vmem:[#allocation7 + $0x30] sm:$0xff]
    %v173 = vld [vmem:[#allocation7 + $0x38] sm:$0xff]
    %v174 = vlaneseq
    %v175 = vshrl.u32 %v174, 7
    %v176 = vsub.s32 1, %v175
    %v177 = vrot.slane %v77, %v176
    %vm178 = vcmask 523264
    %v180 = vsel %vm178, %v165, 0
    %182 = vmatprep.subr.mxu0 0.0
    %183 = vmatpush1.msra.mxu0 %v166
    %184 = vmatprep.subr.mxu0 0.0
    %185 = vmatpush1.msra.mxu0 %v167
    %186 = vmatprep.subr.mxu0 0.0
    %187 = vmatpush1.msra.mxu0 %v168
    %188 = vmatprep.subr.mxu0 0.0
    %189 = vmatpush1.msra.mxu0 %v169
    %190 = vmatprep.subr.mxu0 0.0
    %191 = vmatpush1.msra.mxu0 %v170
    %192 = vmatprep.subr.mxu0 0.0
    %193 = vmatpush1.msra.mxu0 %v171
    %194 = vmatprep.subr.mxu0 0.0
    %195 = vmatpush1.msra.mxu0 %v172
    %196 = vmatprep.subr.mxu0 0.0
    %197 = vmatpush1.msra.mxu0 %v173
    %198 = vmatprep.subr.mxu0 0.0
    %199 = vmatpush1.msra.mxu0 0.0
    %200 = vmatprep.subr.mxu0 0.0
    %201 = vmatpush1.msra.mxu0 0.0
    %202 = vmatprep.subr.mxu0 0.0
    %203 = vmatpush1.msra.mxu0 0.0
    %204 = vmatprep.subr.mxu0 0.0
    %205 = vmatpush1.msra.mxu0 0.0
    %206 = vmatprep.subr.mxu0 0.0
    %207 = vmatpush1.msra.mxu0 0.0
    %208 = vmatprep.subr.mxu0 0.0
    %209 = vmatpush1.msra.mxu0 0.0
    %210 = vmatprep.subr.mxu0 0.0
    %211 = vmatpush1.msra.mxu0 0.0
    %212 = vmatprep.subr.mxu0 0.0
    %213 = vmatpush1.msra.mxu0 0.0
    %214 = vmatprep.subr.mxu0 0.0
    %215 = vmatpush1.msra.mxu0 0.0
    %216 = vmatprep.subr.mxu0 0.0
    %217 = vmatpush1.msra.mxu0 0.0
    %218 = vmatprep.subr.mxu0 0.0
    %219 = vmatpush1.msra.mxu0 0.0
    %220 = vmatprep.subr.mxu0 0.0
    %221 = vmatpush1.msra.mxu0 0.0
    %222 = vmatprep.subr.mxu0 0.0
    %223 = vmatpush1.msra.mxu0 0.0
    %224 = vmatprep.subr.mxu0 0.0
    %225 = vmatpush1.msra.mxu0 0.0
    %226 = vmatprep.subr.mxu0 0.0
    %227 = vmatpush1.msra.mxu0 0.0
    %228 = vmatprep.subr.mxu0 0.0
    %229 = vmatpush1.msra.mxu0 0.0
    %230 = vmatprep.subr.mxu0 0.0
    %231 = vmatpush1.msra.mxu0 0.0
    %232 = vmatprep.subr.mxu0 0.0
    %233 = vmatpush1.msra.mxu0 0.0
    %234 = vmatprep.subr.mxu0 0.0
    %235 = vmatpush1.msra.mxu0 0.0
    %236 = vmatprep.subr.mxu0 0.0
    %237 = vmatpush1.msra.mxu0 0.0
    %238 = vmatprep.subr.mxu0 0.0
    %239 = vmatpush1.msra.mxu0 0.0
    %240 = vmatprep.subr.mxu0 0.0
    %241 = vmatpush1.msra.mxu0 0.0
    %242 = vmatprep.subr.mxu0 0.0
    %243 = vmatpush1.msra.mxu0 0.0
    %244 = vmatprep.subr.mxu0 0.0
    %245 = vmatpush1.msra.mxu0 0.0
    %246 = vmatprep.mubr.f32.mxu0 0.0
    %247 = vmatmul.mubr.f32.gmra.mrb[0].mxu0 %v180
    %v248 = vpop.f32.mrb[0].mxu0
    %v249 = vadd.f32 %v177, %v248
    %v250 = vpop.f32.mrb[0].mxu0
    %251 = vdwg.mxu0
    %v252 = vmax.f32 %v249, 0.0
    %s253 = scalar_lea.vmem [#allocation7], 64
    %v254 = vld [vmem:[%s253] sm:$0xff]
    %v255 = vld [vmem:[%s253 + $0x8] sm:$0xff]
    %v256 = vld [vmem:[%s253 + $0x10] sm:$0xff]
    %v257 = vld [vmem:[%s253 + $0x18] sm:$0xff]
    %v258 = vld [vmem:[%s253 + $0x20] sm:$0xff]
    %v259 = vld [vmem:[%s253 + $0x28] sm:$0xff]
    %v260 = vld [vmem:[%s253 + $0x30] sm:$0xff]
    %v261 = vld [vmem:[%s253 + $0x38] sm:$0xff]
    %v262 = vlaneseq
    %v263 = vshrl.u32 %v262, 7
    %v264 = vsub.s32 2, %v263
    %v265 = vrot.slane %v77, %v264
    %v267 = vsel %vm178, %v252, 0
    %269 = vmatprep.subr.mxu0 0.0
    %270 = vmatpush1.msra.mxu0 %v254
    %271 = vmatprep.subr.mxu0 0.0
    %272 = vmatpush1.msra.mxu0 %v255
    %273 = vmatprep.subr.mxu0 0.0
    %274 = vmatpush1.msra.mxu0 %v256
    %275 = vmatprep.subr.mxu0 0.0
    %276 = vmatpush1.msra.mxu0 %v257
    %277 = vmatprep.subr.mxu0 0.0
    %278 = vmatpush1.msra.mxu0 %v258
    %279 = vmatprep.subr.mxu0 0.0
    %280 = vmatpush1.msra.mxu0 %v259
    %281 = vmatprep.subr.mxu0 0.0
    %282 = vmatpush1.msra.mxu0 %v260
    %283 = vmatprep.subr.mxu0 0.0
    %284 = vmatpush1.msra.mxu0 %v261
    %285 = vmatprep.subr.mxu0 0.0
    %286 = vmatpush1.msra.mxu0 0.0
    %287 = vmatprep.subr.mxu0 0.0
    %288 = vmatpush1.msra.mxu0 0.0
    %289 = vmatprep.subr.mxu0 0.0
    %290 = vmatpush1.msra.mxu0 0.0
    %291 = vmatprep.subr.mxu0 0.0
    %292 = vmatpush1.msra.mxu0 0.0
    %293 = vmatprep.subr.mxu0 0.0
    %294 = vmatpush1.msra.mxu0 0.0
    %295 = vmatprep.subr.mxu0 0.0
    %296 = vmatpush1.msra.mxu0 0.0
    %297 = vmatprep.subr.mxu0 0.0
    %298 = vmatpush1.msra.mxu0 0.0
    %299 = vmatprep.subr.mxu0 0.0
    %300 = vmatpush1.msra.mxu0 0.0
    %301 = vmatprep.subr.mxu0 0.0
    %302 = vmatpush1.msra.mxu0 0.0
    %303 = vmatprep.subr.mxu0 0.0
    %304 = vmatpush1.msra.mxu0 0.0
    %305 = vmatprep.subr.mxu0 0.0
    %306 = vmatpush1.msra.mxu0 0.0
    %307 = vmatprep.subr.mxu0 0.0
    %308 = vmatpush1.msra.mxu0 0.0
    %309 = vmatprep.subr.mxu0 0.0
    %310 = vmatpush1.msra.mxu0 0.0
    %311 = vmatprep.subr.mxu0 0.0
    %312 = vmatpush1.msra.mxu0 0.0
    %313 = vmatprep.subr.mxu0 0.0
    %314 = vmatpush1.msra.mxu0 0.0
    %315 = vmatprep.subr.mxu0 0.0
    %316 = vmatpush1.msra.mxu0 0.0
    %317 = vmatprep.subr.mxu0 0.0
    %318 = vmatpush1.msra.mxu0 0.0
    %319 = vmatprep.subr.mxu0 0.0
    %320 = vmatpush1.msra.mxu0 0.0
    %321 = vmatprep.subr.mxu0 0.0
    %322 = vmatpush1.msra.mxu0 0.0
    %323 = vmatprep.subr.mxu0 0.0
    %324 = vmatpush1.msra.mxu0 0.0
    %325 = vmatprep.subr.mxu0 0.0
    %326 = vmatpush1.msra.mxu0 0.0
    %327 = vmatprep.subr.mxu0 0.0
    %328 = vmatpush1.msra.mxu0 0.0
    %329 = vmatprep.subr.mxu0 0.0
    %330 = vmatpush1.msra.mxu0 0.0
    %331 = vmatprep.subr.mxu0 0.0
    %332 = vmatpush1.msra.mxu0 0.0
    %333 = vmatprep.mubr.f32.mxu0 0.0
    %334 = vmatmul.mubr.f32.gmra.mrb[0].mxu0 %v267
    %v335 = vpop.f32.mrb[0].mxu0
    %v336 = vadd.f32 %v265, %v335
    %v337 = vpop.f32.mrb[0].mxu0
    %338 = vdwg.mxu0
    %v339 = vmax.f32 %v336, 0.0
    %v340 = vld [vmem:[#allocation8] sm:$0xff]
    %v341 = vld [vmem:[#allocation8 + $0x8] sm:$0xff]
    %v342 = vld [vmem:[#allocation8 + $0x10] sm:$0xff]
    %v343 = vld [vmem:[#allocation8 + $0x18] sm:$0xff]
    %v344 = vld [vmem:[#allocation8 + $0x20] sm:$0xff]
    %v345 = vld [vmem:[#allocation8 + $0x28] sm:$0xff]
    %v346 = vld [vmem:[#allocation8 + $0x30] sm:$0xff]
    %v347 = vld [vmem:[#allocation8 + $0x38] sm:$0xff]
    %v348 = vld [vmem:[#allocation8 + $0x40] sm:$0xff]
    %v349 = vld [vmem:[#allocation8 + $0x48] sm:$0xff]
    %v350 = vld [vmem:[#allocation8 + $0x50] sm:$0xff]
    %v351 = vld [vmem:[#allocation8 + $0x58] sm:$0xff]
    %v352 = vld [vmem:[#allocation8 + $0x60] sm:$0xff]
    %v353 = vld [vmem:[#allocation8 + $0x68] sm:$0xff]
    %v354 = vld [vmem:[#allocation8 + $0x70] sm:$0xff]
    %v355 = vld [vmem:[#allocation8 + $0x78] sm:$0xff]
    %v356 = vld [vmem:[#allocation8 + $0x80] sm:$0xff]
    %v357 = vld [vmem:[#allocation8 + $0x88] sm:$0xff]
    %v358 = vld [vmem:[#allocation8 + $0x90] sm:$0xff]
    %v359 = vld [vmem:[#allocation8 + $0x98] sm:$0xff]
    %v360 = vld [vmem:[#allocation8 + $0xa0] sm:$0xff]
    %v361 = vld [vmem:[#allocation8 + $0xa8] sm:$0xff]
    %v362 = vld [vmem:[#allocation8 + $0xb0] sm:$0xff]
    %v363 = vld [vmem:[#allocation8 + $0xb8] sm:$0xff]
    %v364 = vld [vmem:[%s5] sm:$0x7]
    %v366 = vlaneseq
    %v367 = vshrl.u32 %v366, 7
    %v368 = vsub.s32 0, %v367
    %v369 = vrot.slane %v364, %v368
    %v370 = vlaneseq
    %v371 = vshrl.u32 %v370, 7
    %v372 = vsub.s32 1, %v371
    %v373 = vrot.slane %v364, %v372
    %v374 = vlaneseq
    %v375 = vshrl.u32 %v374, 7
    %v376 = vsub.s32 2, %v375
    %v377 = vrot.slane %v364, %v376
    %v382 = vsel %vm178, %v339, 0
    %384 = vmatprep.subr.mxu0 %v341
    %385 = vmatpush1.msra.mxu0 %v340
    %386 = vmatprep.subr.mxu0 %v344
    %387 = vmatpush1.msra.mxu0 %v343
    %388 = vmatprep.subr.mxu0 %v347
    %389 = vmatpush1.msra.mxu0 %v346
    %390 = vmatprep.subr.mxu0 %v350
    %391 = vmatpush1.msra.mxu0 %v349
    %392 = vmatprep.subr.mxu0 %v353
    %393 = vmatpush1.msra.mxu0 %v352
    %394 = vmatprep.subr.mxu0 %v356
    %395 = vmatpush1.msra.mxu0 %v355
    %396 = vmatprep.subr.mxu0 %v359
    %397 = vmatpush1.msra.mxu0 %v358
    %398 = vmatprep.subr.mxu0 %v362
    %399 = vmatpush1.msra.mxu0 %v361
    %400 = vmatprep.subr.mxu0 0.0
    %401 = vmatpush1.msra.mxu0 0.0
    %402 = vmatprep.subr.mxu0 0.0
    %403 = vmatpush1.msra.mxu0 0.0
    %404 = vmatprep.subr.mxu0 0.0
    %405 = vmatpush1.msra.mxu0 0.0
    %406 = vmatprep.subr.mxu0 0.0
    %407 = vmatpush1.msra.mxu0 0.0
    %408 = vmatprep.subr.mxu0 0.0
    %409 = vmatpush1.msra.mxu0 0.0
    %410 = vmatprep.subr.mxu0 0.0
    %411 = vmatpush1.msra.mxu0 0.0
    %412 = vmatprep.subr.mxu0 0.0
    %413 = vmatpush1.msra.mxu0 0.0
    %414 = vmatprep.subr.mxu0 0.0
    %415 = vmatpush1.msra.mxu0 0.0
    %416 = vmatprep.subr.mxu0 0.0
    %417 = vmatpush1.msra.mxu0 0.0
    %418 = vmatprep.subr.mxu0 0.0
    %419 = vmatpush1.msra.mxu0 0.0
    %420 = vmatprep.subr.mxu0 0.0
    %421 = vmatpush1.msra.mxu0 0.0
    %422 = vmatprep.subr.mxu0 0.0
    %423 = vmatpush1.msra.mxu0 0.0
    %424 = vmatprep.subr.mxu0 0.0
    %425 = vmatpush1.msra.mxu0 0.0
    %426 = vmatprep.subr.mxu0 0.0
    %427 = vmatpush1.msra.mxu0 0.0
    %428 = vmatprep.subr.mxu0 0.0
    %429 = vmatpush1.msra.mxu0 0.0
    %430 = vmatprep.subr.mxu0 0.0
    %431 = vmatpush1.msra.mxu0 0.0
    %432 = vmatprep.subr.mxu0 0.0
    %433 = vmatpush1.msra.mxu0 0.0
    %434 = vmatprep.subr.mxu0 0.0
    %435 = vmatpush1.msra.mxu0 0.0
    %436 = vmatprep.subr.mxu0 0.0
    %437 = vmatpush1.msra.mxu0 0.0
    %438 = vmatprep.subr.mxu0 0.0
    %439 = vmatpush1.msra.mxu0 0.0
    %440 = vmatprep.subr.mxu0 0.0
    %441 = vmatpush1.msra.mxu0 0.0
    %442 = vmatprep.subr.mxu0 0.0
    %443 = vmatpush1.msra.mxu0 0.0
    %444 = vmatprep.subr.mxu0 0.0
    %445 = vmatpush1.msra.mxu0 0.0
    %446 = vmatprep.subr.mxu0 0.0
    %447 = vmatpush1.msra.mxu0 0.0
    %448 = vmatprep.mubr.f32.mxu0 0.0
    %449 = vmatmul.mubr.f32.gmra.mrb[0].mxu0 %v382
    %v450 = vpop.f32.mrb[0].mxu0
    %v451 = vadd.f32 %v369, %v450
    %v452 = vpop.f32.mrb[0].mxu0
    %v453 = vadd.f32 %v373, %v452
    %454 = vdwg.mxu0
    %455 = vmatprep.subr.mxu0 0.0
    %456 = vmatpush1.msra.mxu0 %v342
    %457 = vmatprep.subr.mxu0 0.0
    %458 = vmatpush1.msra.mxu0 %v345
    %459 = vmatprep.subr.mxu0 0.0
    %460 = vmatpush1.msra.mxu0 %v348
    %461 = vmatprep.subr.mxu0 0.0
    %462 = vmatpush1.msra.mxu0 %v351
    %463 = vmatprep.subr.mxu0 0.0
    %464 = vmatpush1.msra.mxu0 %v354
    %465 = vmatprep.subr.mxu0 0.0
    %466 = vmatpush1.msra.mxu0 %v357
    %467 = vmatprep.subr.mxu0 0.0
    %468 = vmatpush1.msra.mxu0 %v360
    %469 = vmatprep.subr.mxu0 0.0
    %470 = vmatpush1.msra.mxu0 %v363
    %471 = vmatprep.subr.mxu0 0.0
    %472 = vmatpush1.msra.mxu0 0.0
    %473 = vmatprep.subr.mxu0 0.0
    %474 = vmatpush1.msra.mxu0 0.0
    %475 = vmatprep.subr.mxu0 0.0
    %476 = vmatpush1.msra.mxu0 0.0
    %477 = vmatprep.subr.mxu0 0.0
    %478 = vmatpush1.msra.mxu0 0.0
    %479 = vmatprep.subr.mxu0 0.0
    %480 = vmatpush1.msra.mxu0 0.0
    %481 = vmatprep.subr.mxu0 0.0
    %482 = vmatpush1.msra.mxu0 0.0
    %483 = vmatprep.subr.mxu0 0.0
    %484 = vmatpush1.msra.mxu0 0.0
    %485 = vmatprep.subr.mxu0 0.0
    %486 = vmatpush1.msra.mxu0 0.0
    %487 = vmatprep.subr.mxu0 0.0
    %488 = vmatpush1.msra.mxu0 0.0
    %489 = vmatprep.subr.mxu0 0.0
    %490 = vmatpush1.msra.mxu0 0.0
    %491 = vmatprep.subr.mxu0 0.0
    %492 = vmatpush1.msra.mxu0 0.0
    %493 = vmatprep.subr.mxu0 0.0
    %494 = vmatpush1.msra.mxu0 0.0
    %495 = vmatprep.subr.mxu0 0.0
    %496 = vmatpush1.msra.mxu0 0.0
    %497 = vmatprep.subr.mxu0 0.0
    %498 = vmatpush1.msra.mxu0 0.0
    %499 = vmatprep.subr.mxu0 0.0
    %500 = vmatpush1.msra.mxu0 0.0
    %501 = vmatprep.subr.mxu0 0.0
    %502 = vmatpush1.msra.mxu0 0.0
    %503 = vmatprep.subr.mxu0 0.0
    %504 = vmatpush1.msra.mxu0 0.0
    %505 = vmatprep.subr.mxu0 0.0
    %506 = vmatpush1.msra.mxu0 0.0
    %507 = vmatprep.subr.mxu0 0.0
    %508 = vmatpush1.msra.mxu0 0.0
    %509 = vmatprep.subr.mxu0 0.0
    %510 = vmatpush1.msra.mxu0 0.0
    %511 = vmatprep.subr.mxu0 0.0
    %512 = vmatpush1.msra.mxu0 0.0
    %513 = vmatprep.subr.mxu0 0.0
    %514 = vmatpush1.msra.mxu0 0.0
    %515 = vmatprep.subr.mxu0 0.0
    %516 = vmatpush1.msra.mxu0 0.0
    %517 = vmatprep.subr.mxu0 0.0
    %518 = vmatpush1.msra.mxu0 0.0
    %519 = vmatprep.mubr.f32.mxu0 0.0
    %520 = vmatmul.mubr.f32.gmra.mrb[0].mxu0 %v382
    %v521 = vpop.f32.mrb[0].mxu0
    %v522 = vadd.f32 %v377, %v521
    %v523 = vpop.f32.mrb[0].mxu0
    %524 = vdwg.mxu0
    %525 = vst [vmem:[#allocation10] sm:$0xff] %v451
    %526 = vst [vmem:[#allocation10 + $0x8] sm:$0xff] %v453
    %527 = vst [vmem:[#allocation10 + $0x10] sm:$0xff] %v522
    // Predicated region
    $region42: #{tpu_custom_call.1} parent=1 // pred_check
      _
    $region43: #{tpu_custom_call.1} parent=1 // pred_check_branch
      %529 = sbr.rel (0) target = $region45
    $region44: #{tpu_custom_call.1} parent=1 // pred_region
      %s531 = ssub.s32 384, 384
      %532 = vsyncadd [#allocation4], %s531
      %s534 = sshll.u32 [#allocation10], 4
      %s535 = int_to_ptr.vmem [resolvable:$true] %s534
      %537 = dma.vmem_to_hbm [thread:$0]  %s535, 384, %s6, [#allocation4]
    $region45: #{tpu_custom_call.1} parent=1 // pred_fallthru
      _
    // Predicated region
    $region46: #{tpu_custom_call.1} parent=1 // pred_check
      _
    $region47: #{tpu_custom_call.1} parent=1 // pred_check_branch
      %539 = sbr.rel (0) target = $region49
    $region48: #{tpu_custom_call.1} parent=1 // pred_region
      %540 = dma.done [#allocation4], 384
    $region49: #{tpu_custom_call.1} parent=1 // pred_fallthru
      _
    %541 = vsyncpa [#allocation3], 1
    %542 = vsyncpa [#allocation6], 1
    %543 = vsyncpa [#allocation9], 1
    %544 = vsyncpa [#allocation4], 1

</llo_original>
